<compile_context>
chip_gen: v7x
topology: tpu7x:2x2x1
jax: 0.10.0
libtpu: 0.0.40
codegen_flags: <defaults>
</compile_context>

<pallas_src>
import functools

import numpy as np
import jax
import jax.numpy as jnp
from jax import lax
from jax.experimental import pallas as pl
from jax.experimental.pallas import tpu as pltpu


def _phase_taps(k, s, p):
    """Per output phase r in [0, s): list of (kernel_idx, delta) such that
    (1-D view)  out[o] += x[o // s + delta] * w[kernel_idx]  for o % s == r."""
    taps = []
    for r in range(s):
        lst = []
        for kk in range(k):
            if (r + p - kk) % s == 0:
                lst.append((kk, (r + p - kk) // s))
        lst.sort(key=lambda t: t[1])
        taps.append(lst)
    return taps


def _cconvt_kernel(x_ref, w_ref, b_ref, o_ref, *, taps_h, lh, tile_q, span_h):
    # x_ref: (1, Hp, Wp*2Cin)    padded, channel-stacked ([re; im]) input plane
    # w_ref: (kH, Wp*2Cin, OC)   banded weights, OC = Wq*s*2Cout (lane-dense)
    # b_ref: (1, OC)             bias tiled over (qw, rw)
    # o_ref: (1, s, tile_q, OC)  h-phase-separated, lane-dense output rows
    oc = o_ref.shape[-1]
    q0 = pl.multiple_of(pl.program_id(1) * tile_q, tile_q)
    # One aligned dynamic load of the row span shared by every h-tap; the
    # per-tap shifted views below are static slices of this value.
    rows = x_ref[0, pl.ds(q0, span_h), :]                  # (span_h, Wp*2Cin)
    bias = b_ref[...]                                      # (1, OC)
    for rh, taps in enumerate(taps_h):                     # static unroll
        acc = jnp.zeros((tile_q, oc), jnp.float32)
        for kh, dh in taps:                                # static unroll
            lhs = rows[dh + lh:dh + lh + tile_q, :]        # (tile_q, Wp*2Cin)
            acc = acc + jnp.dot(lhs, w_ref[kh],
                                preferred_element_type=jnp.float32)
        o_ref[0, rh, :, :] = (acc + bias).astype(o_ref.dtype)


def complex_conv_transpose2d(x, w_r, w_i, b_r, b_i, *, stride, padding,
                             output_padding):
    """Complex transposed 2D convolution (PyTorch ConvTranspose2d semantics).

    x: complex64 (N, Cin, H, W); w_*: f32 (Cin, Cout, kH, kW); b_*: f32 (Cout,)
    returns complex64 (N, Cout, H_out, W_out)
    """
    N, Cin, H, W = x.shape
    _, Cout, kH, kW = w_r.shape
    s, p, op = int(stride), int(padding), int(output_padding)
    if op >= s:
        raise ValueError("output_padding must be smaller than stride")
    C2i, C2o = 2 * Cin, 2 * Cout

    H_out = (H - 1) * s - 2 * p + kH + op
    W_out = (W - 1) * s - 2 * p + kW + op
    Hq = -(-H_out // s)          # output rows per h-phase (ceil)
    Wq = -(-W_out // s)          # output cols per w-phase (ceil)

    # Static polyphase tap tables (one list of (k_idx, delta) per phase).
    taps_h = _phase_taps(kH, s, p)
    taps_w = _phase_taps(kW, s, p)
    dh_all = [d for lst in taps_h for _, d in lst] or [0]
    dw_all = [d for lst in taps_w for _, d in lst] or [0]
    lh = max(0, -min(dh_all))
    lw = max(0, -min(dw_all))

    # Row tiling over the Hq "phase rows": spatial grid axis for pipelining /
    # megacore sharding; the GEMM's MXU occupancy comes from K/N (=136/256
    # here), so a small M (=tile_q) per matmul is fine at these channel counts.
    tile_q = Hq if Hq < 8 else 8
    n_t = -(-Hq // tile_q)
    hq_pad = n_t * tile_q

    rh_pad = max(0, hq_pad + max(dh_all) - H)    # high halo pad along H
    rw_pad = max(0, Wq + max(dw_all) - W)        # high halo pad along W
    Hp = H + lh + rh_pad
    Wp = W + lw + rw_pad
    span_h = tile_q + max(dh_all) + lh
    OC = Wq * s * C2o

    # ---- input: channel-stack real/imag, NHWC, small halo pad, flatten W*C.
    # TODO(synk): fuse these layout passes into the producer (or read NCHW
    # real/imag directly with a manual-DMA kernel) for very large activations.
    xr = jnp.real(x).astype(jnp.float32)
    xi = jnp.imag(x).astype(jnp.float32)
    x_cat = jnp.concatenate([xr, xi], axis=1)                 # (N, 2Cin, H, W)
    x_nhwc = jnp.transpose(x_cat, (0, 2, 3, 1))               # (N, H, W, 2Cin)
    x_padded = jnp.pad(x_nhwc, ((0, 0), (lh, rh_pad), (lw, rw_pad), (0, 0)))
    x_flat = x_padded.reshape(N, Hp, Wp * C2i)

    # ---- complex block weight (kH, kW, 2Cin, 2Cout): [[Wr, Wi], [-Wi, Wr]].
    wr = jnp.transpose(w_r, (2, 3, 0, 1)).astype(jnp.float32)
    wi = jnp.transpose(w_i, (2, 3, 0, 1)).astype(jnp.float32)
    w_blk = jnp.concatenate(
        [jnp.concatenate([wr, wi], axis=-1),     # rows fed by x.real
         jnp.concatenate([-wi, wr], axis=-1)],   # rows fed by x.imag
        axis=2)                                                # (kH,kW,2Ci,2Co)

    # ---- fold width taps + width phases into a banded (block-Toeplitz)
    # weight (kH, Wp*2Cin, Wq*s*2Cout) via a static 0/1 selector.
    sel = np.zeros((s, kW, Wp, Wq), np.float32)
    for rw in range(s):
        for kw, dw in taps_w[rw]:
            for qw in range(Wq):
                sel[rw, kw, qw + dw + lw, qw] = 1.0
    w_band = jnp.einsum('rkpq,hkio->hpiqro', jnp.asarray(sel), w_blk)
    w_band = w_band.reshape(kH, Wp * C2i, OC)

    bias_c2 = jnp.concatenate([b_r - b_i, b_r + b_i]).astype(jnp.float32)
    bias_row = jnp.tile(bias_c2, Wq * s).reshape(1, OC)

    kernel = functools.partial(_cconvt_kernel, taps_h=taps_h, lh=lh,
                               tile_q=tile_q, span_h=span_h)

    y = pl.pallas_call(
        kernel,
        out_shape=jax.ShapeDtypeStruct((N, s, hq_pad, OC), jnp.float32),
        grid_spec=pltpu.PrefetchScalarGridSpec(
            num_scalar_prefetch=0,
            grid=(N, n_t),
            in_specs=[
                # Full padded plane per batch (tiny here); constant across the
                # row-tile axis so it is fetched once per batch.
                pl.BlockSpec((1, Hp, Wp * C2i), lambda n, t: (n, 0, 0)),
                pl.BlockSpec((kH, Wp * C2i, OC), lambda n, t: (0, 0, 0)),
                pl.BlockSpec((1, OC), lambda n, t: (0, 0)),
            ],
            out_specs=pl.BlockSpec((1, s, tile_q, OC),
                                   lambda n, t: (n, 0, t, 0)),
        ),
        compiler_params=pltpu.CompilerParams(
            dimension_semantics=("parallel", "parallel"),
            vmem_limit_bytes=32 * 1024 * 1024),
    )(x_flat, w_band, bias_row)

    # ---- interleave h-phases, crop, repack as NCHW complex (one small pass).
    y = y.reshape(N, s, hq_pad, Wq * s, C2o)
    y = jnp.transpose(y, (0, 2, 1, 3, 4)).reshape(N, hq_pad * s, Wq * s, C2o)
    y = y[:, :H_out, :W_out, :]
    out = lax.complex(y[..., :Cout], y[..., Cout:])
    return jnp.transpose(out, (0, 3, 1, 2))


# ---------------- independent reference (plain JAX, scatter formulation) ----
def _convt2d_ref(x, w, b, *, stride, padding, output_padding):
    N, Cin, H, W = x.shape
    _, Cout, kH, kW = w.shape
    s, p, op = stride, padding, output_padding
    H_out = (H - 1) * s - 2 * p + kH + op
    W_out = (W - 1) * s - 2 * p + kW + op
    H_full = (H - 1) * s + kH
    W_full = (W - 1) * s + kW
    out = jnp.zeros((N, Cout, H_full, W_full), jnp.float32)
    for kh in range(kH):
        for kw in range(kW):
            contrib = jnp.einsum('ncij,cd->ndij', x, w[:, :, kh, kw],
                                 precision=lax.Precision.HIGHEST)
            out = out.at[:, :, kh:kh + (H - 1) * s + 1:s,
                               kw:kw + (W - 1) * s + 1:s].add(contrib)
    out = out[:, :, p:, p:][:, :, :H_out, :W_out]
    out = jnp.pad(out, ((0, 0), (0, 0),
                        (0, H_out - out.shape[2]), (0, W_out - out.shape[3])))
    return out + b[None, :, None, None]


def _complex_convt_ref(x, w_r, w_i, b_r, b_i, **kw):
    xr = jnp.real(x).astype(jnp.float32)
    xi = jnp.imag(x).astype(jnp.float32)
    rr = _convt2d_ref(xr, w_r, b_r, **kw)
    ii = _convt2d_ref(xi, w_i, b_i, **kw)
    ri = _convt2d_ref(xr, w_i, b_i, **kw)
    ir = _convt2d_ref(xi, w_r, b_r, **kw)
    return lax.complex(rr - ii, ri + ir)


if __name__ == "__main__":
    key = jax.random.PRNGKey(0)
    kx_r, kx_i, kw_r, kw_i, kb_r, kb_i = jax.random.split(key, 6)

    N, Cin, Cout, H, W = 2, 4, 4, 16, 16
    ksz, stride, padding, output_padding = 3, 2, 1, 1

    x = lax.complex(
        jax.random.normal(kx_r, (N, Cin, H, W), dtype=jnp.float32),
        jax.random.normal(kx_i, (N, Cin, H, W), dtype=jnp.float32))

    # xavier_uniform-style init (deterministic JAX stand-in for torch init).
    limit = (6.0 / (Cin * ksz * ksz + Cout * ksz * ksz)) ** 0.5
    w_r = jax.random.uniform(kw_r, (Cin, Cout, ksz, ksz), jnp.float32,
                             minval=-limit, maxval=limit)
    w_i = jax.random.uniform(kw_i, (Cin, Cout, ksz, ksz), jnp.float32,
                             minval=-limit, maxval=limit)
    b_r = 0.1 * jax.random.normal(kb_r, (Cout,), dtype=jnp.float32)
    b_i = 0.1 * jax.random.normal(kb_i, (Cout,), dtype=jnp.float32)

    fn = jax.jit(functools.partial(
        complex_conv_transpose2d, stride=stride, padding=padding,
        output_padding=output_padding))
    out = jax.block_until_ready(fn(x, w_r, w_i, b_r, b_i))

    ref = _complex_convt_ref(x, w_r, w_i, b_r, b_i, stride=stride,
                             padding=padding, output_padding=output_padding)

    H_out = (H - 1) * stride - 2 * padding + ksz + output_padding
    W_out = (W - 1) * stride - 2 * padding + ksz + output_padding
    assert out.shape == (N, Cout, H_out, W_out), out.shape
    assert out.dtype == jnp.complex64, out.dtype
    max_err = float(jnp.max(jnp.abs(out - ref)))
    assert max_err < 5e-3, f"max abs error vs reference: {max_err}"

    print("KERNEL_OK")
</pallas_src>

<mosaic_0001>
module attributes {stable_mosaic.version = 11 : i64} {
  func.func @_cconvt_kernel(%arg0: i32, %arg1: i32, %arg2: memref<1x17x136xf32, #tpu.memory_space<vmem>>, %arg3: memref<3x136x256xf32, #tpu.memory_space<vmem>>, %arg4: memref<1x256xf32, #tpu.memory_space<vmem>>, %arg5: memref<1x2x8x256xf32, #tpu.memory_space<vmem>>) attributes {dimension_semantics = [#tpu.dimension_semantics<parallel>, #tpu.dimension_semantics<parallel>], iteration_bounds = array<i64: 2, 2>, scalar_prefetch = 0 : i64, scratch_operands = 0 : i64, tpu.core_type = #tpu.core_type<tc>, window_params = [{transform_indices = @transform_0, window_bounds = array<i64: 1, 17, 136>}, {pipeline_mode = #tpu.pipeline_mode<synchronous>, transform_indices = @transform_1, window_bounds = array<i64: 3, 136, 256>}, {pipeline_mode = #tpu.pipeline_mode<synchronous>, transform_indices = @transform_2, window_bounds = array<i64: 1, 256>}, {transform_indices = @transform_3, window_bounds = array<i64: 1, 2, 8, 256>}]} {
    %c8_i32 = arith.constant 8 : i32
    %0 = arith.muli %arg1, %c8_i32 : i32
    %1 = tpu.assume_multiple %0, 8 : i32
    %c0 = arith.constant 0 : index
    %2 = arith.index_cast %1 : i32 to index
    %c0_0 = arith.constant 0 : index
    %3 = vector.load %arg2[%c0, %2, %c0_0] : memref<1x17x136xf32, #tpu.memory_space<vmem>>, vector<1x9x136xf32>
    %4 = vector.shape_cast %3 : vector<1x9x136xf32> to vector<9x136xf32>
    %c0_1 = arith.constant 0 : index
    %c0_2 = arith.constant 0 : index
    %5 = vector.load %arg4[%c0_1, %c0_2] : memref<1x256xf32, #tpu.memory_space<vmem>>, vector<1x256xf32>
    %cst = arith.constant 0.000000e+00 : f32
    %6 = vector.broadcast %cst : f32 to vector<8x256xf32>
    %7 = vector.extract_strided_slice %4 {offsets = [0, 0], sizes = [8, 136], strides = [1, 1]} : vector<9x136xf32> to vector<8x136xf32>
    %c1 = arith.constant 1 : index
    %c0_3 = arith.constant 0 : index
    %c0_4 = arith.constant 0 : index
    %8 = vector.load %arg3[%c1, %c0_3, %c0_4] : memref<3x136x256xf32, #tpu.memory_space<vmem>>, vector<1x136x256xf32>
    %9 = vector.shape_cast %8 : vector<1x136x256xf32> to vector<136x256xf32>
    %cst_5 = arith.constant dense<0.000000e+00> : vector<8x256xf32>
    %10 = tpu.matmul %7, %9, %cst_5 {dimension_numbers = #tpu.dot_dimension_numbers<[1], [0], [0], [1], [0, 0, 1, 1], [], []>} : vector<8x136xf32>, vector<136x256xf32>, vector<8x256xf32> -> vector<8x256xf32>
    %11 = arith.addf %6, %10 : vector<8x256xf32>
    %12 = vector.broadcast %5 : vector<1x256xf32> to vector<8x256xf32>
    %13 = arith.addf %11, %12 : vector<8x256xf32>
    %c0_6 = arith.constant 0 : index
    %c0_7 = arith.constant 0 : index
    %c0_8 = arith.constant 0 : index
    %c0_9 = arith.constant 0 : index
    %14 = vector.load %arg5[%c0_6, %c0_7, %c0_8, %c0_9] : memref<1x2x8x256xf32, #tpu.memory_space<vmem>>, vector<1x1x8x256xf32>
    %15 = vector.shape_cast %14 : vector<1x1x8x256xf32> to vector<8x256xf32>
    %16 = vector.shape_cast %13 : vector<8x256xf32> to vector<1x1x8x256xf32>
    tpu.vector_store %arg5[%c0_6, %c0_7, %c0_8, %c0_9], %16 {strides = array<i32>} : memref<1x2x8x256xf32, #tpu.memory_space<vmem>>, vector<1x1x8x256xf32>,
    %cst_10 = arith.constant 0.000000e+00 : f32
    %17 = vector.broadcast %cst_10 : f32 to vector<8x256xf32>
    %18 = vector.extract_strided_slice %4 {offsets = [0, 0], sizes = [8, 136], strides = [1, 1]} : vector<9x136xf32> to vector<8x136xf32>
    %c2 = arith.constant 2 : index
    %c0_11 = arith.constant 0 : index
    %c0_12 = arith.constant 0 : index
    %19 = vector.load %arg3[%c2, %c0_11, %c0_12] : memref<3x136x256xf32, #tpu.memory_space<vmem>>, vector<1x136x256xf32>
    %20 = vector.shape_cast %19 : vector<1x136x256xf32> to vector<136x256xf32>
    %cst_13 = arith.constant dense<0.000000e+00> : vector<8x256xf32>
    %21 = tpu.matmul %18, %20, %cst_13 {dimension_numbers = #tpu.dot_dimension_numbers<[1], [0], [0], [1], [0, 0, 1, 1], [], []>} : vector<8x136xf32>, vector<136x256xf32>, vector<8x256xf32> -> vector<8x256xf32>
    %22 = arith.addf %17, %21 : vector<8x256xf32>
    %23 = vector.extract_strided_slice %4 {offsets = [1, 0], sizes = [8, 136], strides = [1, 1]} : vector<9x136xf32> to vector<8x136xf32>
    %c0_14 = arith.constant 0 : index
    %c0_15 = arith.constant 0 : index
    %c0_16 = arith.constant 0 : index
    %24 = vector.load %arg3[%c0_14, %c0_15, %c0_16] : memref<3x136x256xf32, #tpu.memory_space<vmem>>, vector<1x136x256xf32>
    %25 = vector.shape_cast %24 : vector<1x136x256xf32> to vector<136x256xf32>
    %cst_17 = arith.constant dense<0.000000e+00> : vector<8x256xf32>
    %26 = tpu.matmul %23, %25, %cst_17 {dimension_numbers = #tpu.dot_dimension_numbers<[1], [0], [0], [1], [0, 0, 1, 1], [], []>} : vector<8x136xf32>, vector<136x256xf32>, vector<8x256xf32> -> vector<8x256xf32>
    %27 = arith.addf %22, %26 : vector<8x256xf32>
    %28 = vector.broadcast %5 : vector<1x256xf32> to vector<8x256xf32>
    %29 = arith.addf %27, %28 : vector<8x256xf32>
    %c0_18 = arith.constant 0 : index
    %c1_19 = arith.constant 1 : index
    %c0_20 = arith.constant 0 : index
    %c0_21 = arith.constant 0 : index
    %30 = vector.load %arg5[%c0_18, %c1_19, %c0_20, %c0_21] : memref<1x2x8x256xf32, #tpu.memory_space<vmem>>, vector<1x1x8x256xf32>
    %31 = vector.shape_cast %30 : vector<1x1x8x256xf32> to vector<8x256xf32>
    %32 = vector.shape_cast %29 : vector<8x256xf32> to vector<1x1x8x256xf32>
    tpu.vector_store %arg5[%c0_18, %c1_19, %c0_20, %c0_21], %32 {strides = array<i32>} : memref<1x2x8x256xf32, #tpu.memory_space<vmem>>, vector<1x1x8x256xf32>,
    return
  }
  func.func @transform_0(%arg0: i32, %arg1: i32) -> (i32, i32, i32) {
    %c0_i32 = arith.constant 0 : i32
    %c0_i32_0 = arith.constant 0 : i32
    %c0_i32_1 = arith.constant 0 : i32
    return %arg0, %c0_i32, %c0_i32_0 : i32, i32, i32
  }
  func.func @transform_1(%arg0: i32, %arg1: i32) -> (i32, i32, i32) {
    %c0_i32 = arith.constant 0 : i32
    %c0_i32_0 = arith.constant 0 : i32
    %c0_i32_1 = arith.constant 0 : i32
    %c0_i32_2 = arith.constant 0 : i32
    return %c0_i32, %c0_i32_0, %c0_i32_1 : i32, i32, i32
  }
  func.func @transform_2(%arg0: i32, %arg1: i32) -> (i32, i32) {
    %c0_i32 = arith.constant 0 : i32
    %c0_i32_0 = arith.constant 0 : i32
    %c0_i32_1 = arith.constant 0 : i32
    return %c0_i32, %c0_i32_0 : i32, i32
  }
  func.func @transform_3(%arg0: i32, %arg1: i32) -> (i32, i32, i32, i32) {
    %c0_i32 = arith.constant 0 : i32
    %c0_i32_0 = arith.constant 0 : i32
    %c0_i32_1 = arith.constant 0 : i32
    return %arg0, %c0_i32, %arg1, %c0_i32_0 : i32, i32, i32, i32
  }
}

</mosaic_0001>

<llo_original>
// kernel: tile.8
$region0: #{tile.8}
  #allocation0 [shape = 's32[1]{0}', space=sflag, size = 0x4, scoped, tag = 'scoped memory for tile.8']
  %s0 = inlined_call_operand.vmem [shape: f32[8], index: 0, kind: input, shape index: {}]
  %s1 = inlined_call_operand.vmem [shape: f32[32,8], index: 1, kind: output, shape index: {}]
  // Predicated region
  $region2: #{tile.8} parent=0 // pred_check
    _
  $region3: #{tile.8} parent=0 // pred_check_branch
    %3 = sbr.rel (0) target = $region5
  $region4: #{tile.8} parent=0 // pred_region
    _
  $region5: #{tile.8} parent=0 // pred_fallthru
    _
  %v4 = vld [vmem:[%s0] ss:$0 sm:$0xff]
  %5 = vst [vmem:[%s1] sm:$0xff] %v4
  %s6 = scalar_lea.vmem %s1, 8
  %7 = vst [vmem:[%s6] sm:$0xff] %v4
  %s8 = scalar_lea.vmem %s1, 16
  %9 = vst [vmem:[%s8] sm:$0xff] %v4
  %s10 = scalar_lea.vmem %s1, 24
  %11 = vst [vmem:[%s10] sm:$0xff] %v4

// kernel: tile.9
$region0: #{tile.9}
  %s0 = inlined_call_operand.vmem [shape: f32[32,8], index: 0, kind: input, shape index: {}]
  %s1 = inlined_call_operand.vmem [shape: f32[1,256], index: 1, kind: output, shape index: {}]
  $region1: #{tile.9} parent=0
    #allocation0 [shape = 'u8[8192]{0}', space=vmem, size = 0x2000, scoped, tag = 'scoped mem for output reshape']
    %s2 = smov 3
    %v3 = vld [vmem:[%s0] ss:$16 sm:%s2]
    %vm4 = vcmask 64512
    %5 = vst.msk [vmem:[#allocation0] ss:$8 sm:$0x3] %vm4, %v3
    %s6 = scalar_lea.vmem %s0, 15
    %s7 = smov 3
    %v8 = vld [vmem:[%s6] ss:$16 sm:%s7]
    %9 = vrot.lane.b32.xlu0 %v8, 120
    %v10 = vpop.permute.xlu0 %9
    %vm11 = vcmask 1048512
    %12 = vst.msk [vmem:[#allocation0] ss:$8 sm:$0x3] %vm11, %v10
    %s13 = scalar_lea.vmem %s0, 14
    %s14 = smov 3
    %v15 = vld [vmem:[%s13] ss:$16 sm:%s14]
    %16 = vrot.lane.b32.xlu0 %v15, 112
    %v17 = vpop.permute.xlu0 %16
    %vm18 = vcmask 982912
    %19 = vst.msk [vmem:[#allocation0] ss:$8 sm:$0x3] %vm18, %v17
    %s20 = scalar_lea.vmem %s0, 13
    %s21 = smov 3
    %v22 = vld [vmem:[%s20] ss:$16 sm:%s21]
    %23 = vrot.lane.b32.xlu0 %v22, 104
    %v24 = vpop.permute.xlu0 %23
    %vm25 = vcmask 917312
    %26 = vst.msk [vmem:[#allocation0] ss:$8 sm:$0x3] %vm25, %v24
    %s27 = scalar_lea.vmem %s0, 12
    %s28 = smov 3
    %v29 = vld [vmem:[%s27] ss:$16 sm:%s28]
    %30 = vrot.lane.b32.xlu0 %v29, 96
    %v31 = vpop.permute.xlu0 %30
    %vm32 = vcmask 851712
    %33 = vst.msk [vmem:[#allocation0] ss:$8 sm:$0x3] %vm32, %v31
    %s34 = scalar_lea.vmem %s0, 11
    %s35 = smov 3
    %v36 = vld [vmem:[%s34] ss:$16 sm:%s35]
    %37 = vrot.lane.b32.xlu0 %v36, 88
    %v38 = vpop.permute.xlu0 %37
    %vm39 = vcmask 786112
    %40 = vst.msk [vmem:[#allocation0] ss:$8 sm:$0x3] %vm39, %v38
    %s41 = scalar_lea.vmem %s0, 10
    %s42 = smov 3
    %v43 = vld [vmem:[%s41] ss:$16 sm:%s42]
    %44 = vrot.lane.b32.xlu0 %v43, 80
    %v45 = vpop.permute.xlu0 %44
    %vm46 = vcmask 720512
    %47 = vst.msk [vmem:[#allocation0] ss:$8 sm:$0x3] %vm46, %v45
    %s48 = scalar_lea.vmem %s0, 9
    %s49 = smov 3
    %v50 = vld [vmem:[%s48] ss:$16 sm:%s49]
    %51 = vrot.lane.b32.xlu0 %v50, 72
    %v52 = vpop.permute.xlu0 %51
    %vm53 = vcmask 654912
    %54 = vst.msk [vmem:[#allocation0] ss:$8 sm:$0x3] %vm53, %v52
    %s55 = scalar_lea.vmem %s0, 8
    %s56 = smov 3
    %v57 = vld [vmem:[%s55] ss:$16 sm:%s56]
    %58 = vrot.lane.b32.xlu0 %v57, 64
    %v59 = vpop.permute.xlu0 %58
    %vm60 = vcmask 589312
    %61 = vst.msk [vmem:[#allocation0] ss:$8 sm:$0x3] %vm60, %v59
    %s62 = scalar_lea.vmem %s0, 7
    %s63 = smov 3
    %v64 = vld [vmem:[%s62] ss:$16 sm:%s63]
    %65 = vrot.lane.b32.xlu0 %v64, 56
    %v66 = vpop.permute.xlu0 %65
    %vm67 = vcmask 523712
    %68 = vst.msk [vmem:[#allocation0] ss:$8 sm:$0x3] %vm67, %v66
    %s69 = scalar_lea.vmem %s0, 6
    %s70 = smov 3
    %v71 = vld [vmem:[%s69] ss:$16 sm:%s70]
    %72 = vrot.lane.b32.xlu0 %v71, 48
    %v73 = vpop.permute.xlu0 %72
    %vm74 = vcmask 458112
    %75 = vst.msk [vmem:[#allocation0] ss:$8 sm:$0x3] %vm74, %v73
    %s76 = scalar_lea.vmem %s0, 5
    %s77 = smov 3
    %v78 = vld [vmem:[%s76] ss:$16 sm:%s77]
    %79 = vrot.lane.b32.xlu0 %v78, 40
    %v80 = vpop.permute.xlu0 %79
    %vm81 = vcmask 392512
    %82 = vst.msk [vmem:[#allocation0] ss:$8 sm:$0x3] %vm81, %v80
    %s83 = scalar_lea.vmem %s0, 4
    %s84 = smov 3
    %v85 = vld [vmem:[%s83] ss:$16 sm:%s84]
    %86 = vrot.lane.b32.xlu0 %v85, 32
    %v87 = vpop.permute.xlu0 %86
    %vm88 = vcmask 326912
    %89 = vst.msk [vmem:[#allocation0] ss:$8 sm:$0x3] %vm88, %v87
    %s90 = scalar_lea.vmem %s0, 3
    %s91 = smov 3
    %v92 = vld [vmem:[%s90] ss:$16 sm:%s91]
    %93 = vrot.lane.b32.xlu0 %v92, 24
    %v94 = vpop.permute.xlu0 %93
    %vm95 = vcmask 261312
    %96 = vst.msk [vmem:[#allocation0] ss:$8 sm:$0x3] %vm95, %v94
    %s97 = scalar_lea.vmem %s0, 2
    %s98 = smov 3
    %v99 = vld [vmem:[%s97] ss:$16 sm:%s98]
    %100 = vrot.lane.b32.xlu0 %v99, 16
    %v101 = vpop.permute.xlu0 %100
    %vm102 = vcmask 195712
    %103 = vst.msk [vmem:[#allocation0] ss:$8 sm:$0x3] %vm102, %v101
    %s104 = scalar_lea.vmem %s0, 1
    %s105 = smov 3
    %v106 = vld [vmem:[%s104] ss:$16 sm:%s105]
    %107 = vrot.lane.b32.xlu0 %v106, 8
    %v108 = vpop.permute.xlu0 %107
    %vm109 = vcmask 130112
    %110 = vst.msk [vmem:[#allocation0] ss:$8 sm:$0x3] %vm109, %v108
    %s112 = sshllo.u32 0, 1
    %v114 = vld [vmem:[#allocation0] sm:%s112]
    %s115 = sshllo.u32 0, 1
    %116 = vst [vmem:[%s1] sm:%s115] %v114
    %s117 = scalar_lea.vmem [#allocation0], 8
    %v118 = vld [vmem:[%s117] sm:%s112]
    %s119 = sshllo.u32 0, 1
    %s120 = scalar_lea.vmem %s1, 1
    %121 = vst [vmem:[%s120] sm:%s119] %v118

// kernel: custom-call
$region0: #{custom-call}
  %s0 = inlined_call_operand.hbm [shape: c64[2,4,16,16], index: 0, kind: input, shape index: {}]
  %s1 = inlined_call_operand.vmem [shape: f32[2,4,16,16], index: 1, kind: output, shape index: {}]
  $region1: #{custom-call} parent=0
    #allocation0 [shape = 's32[1]{0}', space=sflag, size = 0x4, scoped, tag = 'scoped memory for custom-call']
    %2 = vsyncpa [#allocation0], 0
    %s3 = sshll.u32 %s1, 4
    %s4 = int_to_ptr.vmem [resolvable:$true] %s3
    %6 = dma.hbm_to_vmem [thread:$0]  %s0, 2048, %s4, [#allocation0]
    %7 = dma.done [#allocation0], 2048
    %8 = vsyncpa [#allocation0], 1

// kernel: custom-call.1
$region0: #{custom-call.1}
  %s0 = inlined_call_operand.hbm [shape: c64[2,4,16,16], index: 0, kind: input, shape index: {}]
  %s1 = inlined_call_operand.vmem [shape: f32[2,4,16,16], index: 1, kind: output, shape index: {}]
  %s2 = scalar_lea.hbm %s0, 2048
  $region1: #{custom-call.1} parent=0
    #allocation0 [shape = 's32[1]{0}', space=sflag, size = 0x4, scoped, tag = 'scoped memory for custom-call.1']
    %3 = vsyncpa [#allocation0], 0
    %s4 = sshll.u32 %s1, 4
    %s5 = int_to_ptr.vmem [resolvable:$true] %s4
    %7 = dma.hbm_to_vmem [thread:$0]  %s2, 2048, %s5, [#allocation0]
    %8 = dma.done [#allocation0], 2048
    %9 = vsyncpa [#allocation0], 1

// kernel: complex_conv_transpose2d.1
$region0: #{complex_conv_transpose2d.1}
  #allocation0 [shape = 'u32[]', space=smem, size = 0x4, offset = 0x4, fixed_abs, tag = 'smem constant byte address 0x4 - core index']
  #allocation1 [shape = 'u32[144,128]{1,0:T(1,128)}', space=vmem, size = 0x12000, scoped, tag = 'internal scratch']
  %s0 = inlined_call_operand.vmem [shape: f32[2,17,136], index: 0, kind: input, shape index: {}]
  %s1 = inlined_call_operand.vmem [shape: f32[3,136,256], index: 1, kind: input, shape index: {}]
  %s2 = inlined_call_operand.vmem [shape: f32[1,256], index: 2, kind: input, shape index: {}]
  %s3 = inlined_call_operand.vmem [shape: f32[2,2,16,256], index: 3, kind: output, shape index: {}]
  %s4 = sld [smem:[#allocation0]]
  $region64: #{complex_conv_transpose2d.1} parent=0
    _
  %s6 = ssub.s32 1, %s4
  %s7 = scalar_select 0, %s6, %s4
  $region1: #{complex_conv_transpose2d.1} parent=0
    #allocation2 [shape = 'u8[32768]{0}', space=vmem, size = 0x8000, scoped, tag = 'output window, operand 0']
    loop: start=0, step=1, limit=6
    $region2: #{complex_conv_transpose2d.1} parent=1 // loop_pre_header
      _
    $region3: #{complex_conv_transpose2d.1} parent=1 // loop_header
      %s9 = sphi 0, %s13
      %p10 = scmp.ge.s32.totalorder %s9, 6
      %s16 = sphi 0, %s28
      %s17 = sphi 0, %s24
      %s18 = sphi 0, %s16
      %s19 = sphi 0, %s17
      %s20 = sphi 0, %s18
      %s21 = sphi 0, %s19
      %s31 = sphi 0, %s33
      %s34 = sphi 0, %s31
      %s35 = sphi 0, %s34
      %s51 = sphi 0, %s35
      %s55 = sphi 0, %s55
      %s57 = sphi 0, %s55
      %s58 = sphi 0, %s57
      %s72 = sphi 0, %s58
      %s76 = sphi 0, %s76
      %s78 = sphi 0, %s76
      %s79 = sphi 0, %s78
      %s93 = sphi 0, %s79
      %s101 = sphi 0, %s103
      %s104 = sphi 0, %s101
      %s105 = sphi 0, %s104
      %s121 = sphi 0, %s105
    $region4: #{complex_conv_transpose2d.1} parent=1 // loop_header_branch
      %12 = sbr.rel (%p10) target = $region8
    $region5: #{complex_conv_transpose2d.1} parent=1 // loop_body
      %s14 = ssub.s32 %s9, 1
      %s15 = ssub.s32 %s9, 2
      %s22 = sadd.s32 1, %s17
      %p23 = scmp.ge.s32.totalorder %s22, 2
      %s24 = scalar_select %p23, 0, %s22
      %s25 = sadd.s32 1, %s16
      %s26 = scalar_select %p23, %s25, %s16
      %p27 = scmp.ge.s32.totalorder %s26, 2
      %s28 = scalar_select %p27, 0, %s26
      %s29 = ssub.s32 %s16, %s28
      %p30 = scmp.eq.s32.totalorder %s29, 0
      %s32 = sadd.s32 %s31, 1
      %s33 = scalar_select %p30, %s31, %s32
      %p36 = pneg %p30
      %p37 = scmp.eq.s32.totalorder %s9, 3
      %p38 = por %p36, %p37
      %p39 = scmp.ne.s32.totalorder %s31, %s34
      %p40 = scmp.eq.s32.totalorder %s9, 0
      %p41 = por %p39, %p40
      %p42 = scmp.ne.s32.totalorder %s31, %s34
      %p43 = scmp.eq.s32.totalorder %s14, 3
      %p44 = por %p42, %p43
      %p45 = scmp.ne.s32.totalorder %s34, %s35
      %p46 = scmp.eq.s32.totalorder %s14, 0
      %p47 = por %p45, %p46
      %p48 = scmp.ne.s32.totalorder %s34, %s35
      %p49 = scmp.eq.s32.totalorder %s15, 3
      %p50 = por %p48, %p49
      %p52 = scmp.ne.s32.totalorder %s35, %s51
      %p53 = scmp.eq.s32.totalorder %s15, 0
      %p54 = por %p52, %p53
      %s56 = sadd.s32 %s55, 1
      %p59 = scmp.eq.s32.totalorder %s9, 3
      %p60 = scmp.ne.s32.totalorder %s55, %s57
      %p61 = scmp.eq.s32.totalorder %s9, 0
      %p62 = por %p60, %p61
      %p63 = scmp.ne.s32.totalorder %s55, %s57
      %p64 = scmp.eq.s32.totalorder %s14, 3
      %p65 = por %p63, %p64
      %p66 = scmp.ne.s32.totalorder %s57, %s58
      %p67 = scmp.eq.s32.totalorder %s14, 0
      %p68 = por %p66, %p67
      %p69 = scmp.ne.s32.totalorder %s57, %s58
      %p70 = scmp.eq.s32.totalorder %s15, 3
      %p71 = por %p69, %p70
      %p73 = scmp.ne.s32.totalorder %s58, %s72
      %p74 = scmp.eq.s32.totalorder %s15, 0
      %p75 = por %p73, %p74
      %s77 = sadd.s32 %s76, 1
      %p80 = scmp.eq.s32.totalorder %s9, 3
      %p81 = scmp.ne.s32.totalorder %s76, %s78
      %p82 = scmp.eq.s32.totalorder %s9, 0
      %p83 = por %p81, %p82
      %p84 = scmp.ne.s32.totalorder %s76, %s78
      %p85 = scmp.eq.s32.totalorder %s14, 3
      %p86 = por %p84, %p85
      %p87 = scmp.ne.s32.totalorder %s78, %s79
      %p88 = scmp.eq.s32.totalorder %s14, 0
      %p89 = por %p87, %p88
      %p90 = scmp.ne.s32.totalorder %s78, %s79
      %p91 = scmp.eq.s32.totalorder %s15, 3
      %p92 = por %p90, %p91
      %p94 = scmp.ne.s32.totalorder %s79, %s93
      %p95 = scmp.eq.s32.totalorder %s15, 0
      %p96 = por %p94, %p95
      %s97 = ssub.s32 %s16, %s28
      %s98 = ssub.s32 %s17, %s24
      %s99 = sor.u32 %s97, %s98
      %p100 = scmp.eq.s32.totalorder %s99, 0
      %s102 = sadd.s32 %s101, 1
      %s103 = scalar_select %p100, %s101, %s102
      %p106 = pneg %p100
      %p107 = scmp.eq.s32.totalorder %s9, 3
      %p108 = por %p106, %p107
      %p109 = scmp.ne.s32.totalorder %s101, %s104
      %p110 = scmp.eq.s32.totalorder %s9, 0
      %p111 = por %p109, %p110
      %p112 = scmp.ne.s32.totalorder %s101, %s104
      %p113 = scmp.eq.s32.totalorder %s14, 3
      %p114 = por %p112, %p113
      %p115 = scmp.ne.s32.totalorder %s104, %s105
      %p116 = scmp.eq.s32.totalorder %s14, 0
      %p117 = por %p115, %p116
      %p118 = scmp.ne.s32.totalorder %s104, %s105
      %p119 = scmp.eq.s32.totalorder %s15, 3
      %p120 = por %p118, %p119
      %p122 = scmp.ne.s32.totalorder %s105, %s121
      %p123 = scmp.eq.s32.totalorder %s15, 0
      %p124 = por %p122, %p123
      %p125 = scmp.le.s32.totalorder 1, %s9
      %p126 = scmp.lt.s32.totalorder %s9, 5
      %p127 = pnand %p125, %p126
      %p128 = pneg %p127
      // Predicated region
      $region9: #{complex_conv_transpose2d.1} parent=5 // pred_check
        _
      $region10: #{complex_conv_transpose2d.1} parent=5 // pred_check_branch
        %130 = sbr.rel (%p127) target = $region12
      $region11: #{complex_conv_transpose2d.1} parent=5 // pred_region
        %s131 = ssub.s32 %s9, 1
        // Predicated region
        $region13: #{complex_conv_transpose2d.1} parent=11 // pred_check
          %p132 = pneg %p68
        $region14: #{complex_conv_transpose2d.1} parent=11 // pred_check_branch
          %134 = sbr.rel (%p132) target = $region16
        $region15: #{complex_conv_transpose2d.1} parent=11 // pred_region
          _
        $region16: #{complex_conv_transpose2d.1} parent=11 // pred_fallthru
          _
        // Predicated region
        $region17: #{complex_conv_transpose2d.1} parent=11 // pred_check
          %p135 = pneg %p89
        $region18: #{complex_conv_transpose2d.1} parent=11 // pred_check_branch
          %137 = sbr.rel (%p135) target = $region20
        $region19: #{complex_conv_transpose2d.1} parent=11 // pred_region
          _
        $region20: #{complex_conv_transpose2d.1} parent=11 // pred_fallthru
          _
      $region12: #{complex_conv_transpose2d.1} parent=5 // pred_fallthru
        _
      %p138 = scmp.lt.s32.totalorder %s9, 4
      // Predicated region
      $region21: #{complex_conv_transpose2d.1} parent=5 // pred_check
        %p139 = pneg %p138
      $region22: #{complex_conv_transpose2d.1} parent=5 // pred_check_branch
        %141 = sbr.rel (%p139) target = $region24
      $region23: #{complex_conv_transpose2d.1} parent=5 // pred_region
        // Predicated region
        $region25: #{complex_conv_transpose2d.1} parent=23 // pred_check
          %p142 = pneg %p41
        $region26: #{complex_conv_transpose2d.1} parent=23 // pred_check_branch
          %144 = sbr.rel (%p142) target = $region28
        $region27: #{complex_conv_transpose2d.1} parent=23 // pred_region
          %p145 = scmp.lt.s32.totalorder %s16, 1
          %s146 = scalar_select %p145, %s16, 1
          %s147 = smul.addr %s146, 6
          %s148 = smul.addr %s147, 8
          %s149 = scalar_lea.vmem %s0, %s148
        $region28: #{complex_conv_transpose2d.1} parent=23 // pred_fallthru
          _
      $region24: #{complex_conv_transpose2d.1} parent=5 // pred_fallthru
        _
      %p150 = scmp.le.s32.totalorder 1, %s9
      %p151 = scmp.lt.s32.totalorder %s9, 5
      %p152 = pnand %p150, %p151
      %p153 = pneg %p152
      // Predicated region
      $region29: #{complex_conv_transpose2d.1} parent=5 // pred_check
        _
      $region30: #{complex_conv_transpose2d.1} parent=5 // pred_check_branch
        %155 = sbr.rel (%p152) target = $region32
      $region31: #{complex_conv_transpose2d.1} parent=5 // pred_region
        %s156 = ssub.s32 %s9, 1
        %p157 = scmp.lt.s32.totalorder %s18, 1
        %s158 = scalar_select %p157, %s18, 1
        %s159 = smul.addr %s158, 6
        %s160 = smul.addr %s159, 8
        %s161 = scalar_lea.vmem %s0, %s160
        %p162 = pneg %p47
        %p163 = pneg %p44
        %p164 = pneg %p68
        %p165 = pneg %p65
        %p166 = pneg %p89
        %p167 = pneg %p86
        %p168 = pneg %p117
        %p169 = pneg %p114
        %s170 = sand.u32 %s104, 1
        %s171 = sand.u32 %s104, 1
        %s172 = smul.addr %s171, 32
        %s173 = scalar_lea.vmem [#allocation2], %s172
        %p174 = scmp.lt.s32.totalorder %s18, 1
        %s175 = scalar_select %p174, %s18, 1
        %s176 = smul.addr %s175, 6
        %s177 = smul.addr %s176, 8
        %s178 = scalar_lea.vmem %s0, %s177
        %s179 = smul.u32 %s19, 8
        %s180 = sshra.s32 %s179, 3
        %s181 = sand.u32 %s179, 7
        %s182 = smul.u32 %s180, 2
        %s183 = smul.addr %s182, 8
        %s184 = scalar_lea.vmem %s178, %s183
        %v185 = vld [vmem:[%s184] sm:$0xff]
        %v186 = vld [vmem:[%s184 + $0x8] sm:$0xff]
        %v187 = vld [vmem:[%s184 + $0x10] sm:$0x1]
        %v188 = vld [vmem:[%s184 + $0x18] sm:$0x1]
        %v189 = vld [vmem:[%s2] sm:$0x3]
        %s190 = scalar_lea.vmem %s1, 272
        %v191 = vld [vmem:[%s190] sm:$0xff]
        %v192 = vld [vmem:[%s190 + $0x8] sm:$0xff]
        %v193 = vld [vmem:[%s190 + $0x10] sm:$0xff]
        %v194 = vld [vmem:[%s190 + $0x18] sm:$0xff]
        %v195 = vld [vmem:[%s190 + $0x20] sm:$0xff]
        %v196 = vld [vmem:[%s190 + $0x28] sm:$0xff]
        %v197 = vld [vmem:[%s190 + $0x30] sm:$0xff]
        %v198 = vld [vmem:[%s190 + $0x38] sm:$0xff]
        %v199 = vld [vmem:[%s190 + $0x40] sm:$0xff]
        %v200 = vld [vmem:[%s190 + $0x48] sm:$0xff]
        %v201 = vld [vmem:[%s190 + $0x50] sm:$0xff]
        %v202 = vld [vmem:[%s190 + $0x58] sm:$0xff]
        %v203 = vld [vmem:[%s190 + $0x60] sm:$0xff]
        %v204 = vld [vmem:[%s190 + $0x68] sm:$0xff]
        %v205 = vld [vmem:[%s190 + $0x70] sm:$0xff]
        %v206 = vld [vmem:[%s190 + $0x78] sm:$0xff]
        %v207 = vld [vmem:[%s190 + $0x80] sm:$0xff]
        %v208 = vld [vmem:[%s190 + $0x88] sm:$0xff]
        %v209 = vld [vmem:[%s190 + $0x90] sm:$0xff]
        %v210 = vld [vmem:[%s190 + $0x98] sm:$0xff]
        %v211 = vld [vmem:[%s190 + $0xa0] sm:$0xff]
        %v212 = vld [vmem:[%s190 + $0xa8] sm:$0xff]
        %v213 = vld [vmem:[%s190 + $0xb0] sm:$0xff]
        %v214 = vld [vmem:[%s190 + $0xb8] sm:$0xff]
        %v215 = vld [vmem:[%s190 + $0xc0] sm:$0xff]
        %v216 = vld [vmem:[%s190 + $0xc8] sm:$0xff]
        %v217 = vld [vmem:[%s190 + $0xd0] sm:$0xff]
        %v218 = vld [vmem:[%s190 + $0xd8] sm:$0xff]
        %v219 = vld [vmem:[%s190 + $0xe0] sm:$0xff]
        %v220 = vld [vmem:[%s190 + $0xe8] sm:$0xff]
        %v221 = vld [vmem:[%s190 + $0xf0] sm:$0xff]
        %v222 = vld [vmem:[%s190 + $0xf8] sm:$0xff]
        %v223 = vld [vmem:[%s190 + $0x100] sm:$0xff]
        %v224 = vld [vmem:[%s190 + $0x108] sm:$0xff]
        %v226 = vlaneseq
        %v227 = vshrl.u32 %v226, 7
        %v228 = vsub.s32 0, %v227
        %v229 = vrot.slane %v189, %v228
        %v230 = vlaneseq
        %v231 = vshrl.u32 %v230, 7
        %v232 = vsub.s32 1, %v231
        %v233 = vrot.slane %v189, %v232
        %vm236 = vcmask 64512
        %v238 = vsel %vm236, %v186, 0
        %240 = vmatprep.subr.mxu0 %v192
        %241 = vmatpush1.msra.mxu0 %v191
        %242 = vmatprep.subr.mxu0 %v194
        %243 = vmatpush1.msra.mxu0 %v193
        %244 = vmatprep.subr.mxu0 %v196
        %245 = vmatpush1.msra.mxu0 %v195
        %246 = vmatprep.subr.mxu0 %v198
        %247 = vmatpush1.msra.mxu0 %v197
        %248 = vmatprep.subr.mxu0 %v200
        %249 = vmatpush1.msra.mxu0 %v199
        %250 = vmatprep.subr.mxu0 %v202
        %251 = vmatpush1.msra.mxu0 %v201
        %252 = vmatprep.subr.mxu0 %v204
        %253 = vmatpush1.msra.mxu0 %v203
        %254 = vmatprep.subr.mxu0 %v206
        %255 = vmatpush1.msra.mxu0 %v205
        %256 = vmatprep.subr.mxu0 %v208
        %257 = vmatpush1.msra.mxu0 %v207
        %258 = vmatprep.subr.mxu0 %v210
        %259 = vmatpush1.msra.mxu0 %v209
        %260 = vmatprep.subr.mxu0 %v212
        %261 = vmatpush1.msra.mxu0 %v211
        %262 = vmatprep.subr.mxu0 %v214
        %263 = vmatpush1.msra.mxu0 %v213
        %264 = vmatprep.subr.mxu0 %v216
        %265 = vmatpush1.msra.mxu0 %v215
        %266 = vmatprep.subr.mxu0 %v218
        %267 = vmatpush1.msra.mxu0 %v217
        %268 = vmatprep.subr.mxu0 %v220
        %269 = vmatpush1.msra.mxu0 %v219
        %270 = vmatprep.subr.mxu0 %v222
        %271 = vmatpush1.msra.mxu0 %v221
        %272 = vmatprep.subr.mxu0 %v224
        %273 = vmatpush1.msra.mxu0 %v223
        %274 = vmatprep.subr.mxu0 0.0
        %275 = vmatpush1.msra.mxu0 0.0
        %276 = vmatprep.subr.mxu0 0.0
        %277 = vmatpush1.msra.mxu0 0.0
        %278 = vmatprep.subr.mxu0 0.0
        %279 = vmatpush1.msra.mxu0 0.0
        %280 = vmatprep.subr.mxu0 0.0
        %281 = vmatpush1.msra.mxu0 0.0
        %282 = vmatprep.subr.mxu0 0.0
        %283 = vmatpush1.msra.mxu0 0.0
        %284 = vmatprep.subr.mxu0 0.0
        %285 = vmatpush1.msra.mxu0 0.0
        %286 = vmatprep.subr.mxu0 0.0
        %287 = vmatpush1.msra.mxu0 0.0
        %288 = vmatprep.subr.mxu0 0.0
        %289 = vmatpush1.msra.mxu0 0.0
        %290 = vmatprep.subr.mxu0 0.0
        %291 = vmatpush1.msra.mxu0 0.0
        %292 = vmatprep.subr.mxu0 0.0
        %293 = vmatpush1.msra.mxu0 0.0
        %294 = vmatprep.subr.mxu0 0.0
        %295 = vmatpush1.msra.mxu0 0.0
        %296 = vmatprep.subr.mxu0 0.0
        %297 = vmatpush1.msra.mxu0 0.0
        %298 = vmatprep.subr.mxu0 0.0
        %299 = vmatpush1.msra.mxu0 0.0
        %300 = vmatprep.subr.mxu0 0.0
        %301 = vmatpush1.msra.mxu0 0.0
        %302 = vmatprep.subr.mxu0 0.0
        %303 = vmatpush1.msra.mxu0 0.0
        %304 = vmatprep.mubr.f32.mxu0 %v238
        %305 = vmatmul.mubr.f32.gmra.mrb[0].mxu0 %v185
        %v306 = vpop.f32.mrb[0].mxu0
        %v307 = vadd.f32 %v229, %v306
        %v308 = vpop.f32.mrb[0].mxu0
        %v309 = vadd.f32 %v233, %v308
        %310 = vdwg.mxu0
        %311 = vst [vmem:[%s173] sm:$0xff] %v307
        %312 = vst [vmem:[%s173 + $0x8] sm:$0xff] %v309
        %s313 = scalar_lea.vmem %s1, 544
        %v314 = vld [vmem:[%s313] sm:$0xff]
        %v315 = vld [vmem:[%s313 + $0x8] sm:$0xff]
        %v316 = vld [vmem:[%s313 + $0x10] sm:$0xff]
        %v317 = vld [vmem:[%s313 + $0x18] sm:$0xff]
        %v318 = vld [vmem:[%s313 + $0x20] sm:$0xff]
        %v319 = vld [vmem:[%s313 + $0x28] sm:$0xff]
        %v320 = vld [vmem:[%s313 + $0x30] sm:$0xff]
        %v321 = vld [vmem:[%s313 + $0x38] sm:$0xff]
        %v322 = vld [vmem:[%s313 + $0x40] sm:$0xff]
        %v323 = vld [vmem:[%s313 + $0x48] sm:$0xff]
        %v324 = vld [vmem:[%s313 + $0x50] sm:$0xff]
        %v325 = vld [vmem:[%s313 + $0x58] sm:$0xff]
        %v326 = vld [vmem:[%s313 + $0x60] sm:$0xff]
        %v327 = vld [vmem:[%s313 + $0x68] sm:$0xff]
        %v328 = vld [vmem:[%s313 + $0x70] sm:$0xff]
        %v329 = vld [vmem:[%s313 + $0x78] sm:$0xff]
        %v330 = vld [vmem:[%s313 + $0x80] sm:$0xff]
        %v331 = vld [vmem:[%s313 + $0x88] sm:$0xff]
        %v332 = vld [vmem:[%s313 + $0x90] sm:$0xff]
        %v333 = vld [vmem:[%s313 + $0x98] sm:$0xff]
        %v334 = vld [vmem:[%s313 + $0xa0] sm:$0xff]
        %v335 = vld [vmem:[%s313 + $0xa8] sm:$0xff]
        %v336 = vld [vmem:[%s313 + $0xb0] sm:$0xff]
        %v337 = vld [vmem:[%s313 + $0xb8] sm:$0xff]
        %v338 = vld [vmem:[%s313 + $0xc0] sm:$0xff]
        %v339 = vld [vmem:[%s313 + $0xc8] sm:$0xff]
        %v340 = vld [vmem:[%s313 + $0xd0] sm:$0xff]
        %v341 = vld [vmem:[%s313 + $0xd8] sm:$0xff]
        %v342 = vld [vmem:[%s313 + $0xe0] sm:$0xff]
        %v343 = vld [vmem:[%s313 + $0xe8] sm:$0xff]
        %v344 = vld [vmem:[%s313 + $0xf0] sm:$0xff]
        %v345 = vld [vmem:[%s313 + $0xf8] sm:$0xff]
        %v346 = vld [vmem:[%s313 + $0x100] sm:$0xff]
        %v347 = vld [vmem:[%s313 + $0x108] sm:$0xff]
        %v348 = vld [vmem:[%s1] sm:$0xff]
        %v349 = vld [vmem:[%s1 + $0x8] sm:$0xff]
        %v350 = vld [vmem:[%s1 + $0x10] sm:$0xff]
        %v351 = vld [vmem:[%s1 + $0x18] sm:$0xff]
        %v352 = vld [vmem:[%s1 + $0x20] sm:$0xff]
        %v353 = vld [vmem:[%s1 + $0x28] sm:$0xff]
        %v354 = vld [vmem:[%s1 + $0x30] sm:$0xff]
        %v355 = vld [vmem:[%s1 + $0x38] sm:$0xff]
        %v356 = vld [vmem:[%s1 + $0x40] sm:$0xff]
        %v357 = vld [vmem:[%s1 + $0x48] sm:$0xff]
        %v358 = vld [vmem:[%s1 + $0x50] sm:$0xff]
        %v359 = vld [vmem:[%s1 + $0x58] sm:$0xff]
        %v360 = vld [vmem:[%s1 + $0x60] sm:$0xff]
        %v361 = vld [vmem:[%s1 + $0x68] sm:$0xff]
        %v362 = vld [vmem:[%s1 + $0x70] sm:$0xff]
        %v363 = vld [vmem:[%s1 + $0x78] sm:$0xff]
        %v364 = vld [vmem:[%s1 + $0x80] sm:$0xff]
        %v365 = vld [vmem:[%s1 + $0x88] sm:$0xff]
        %v366 = vld [vmem:[%s1 + $0x90] sm:$0xff]
        %v367 = vld [vmem:[%s1 + $0x98] sm:$0xff]
        %v368 = vld [vmem:[%s1 + $0xa0] sm:$0xff]
        %v369 = vld [vmem:[%s1 + $0xa8] sm:$0xff]
        %v370 = vld [vmem:[%s1 + $0xb0] sm:$0xff]
        %v371 = vld [vmem:[%s1 + $0xb8] sm:$0xff]
        %v372 = vld [vmem:[%s1 + $0xc0] sm:$0xff]
        %v373 = vld [vmem:[%s1 + $0xc8] sm:$0xff]
        %v374 = vld [vmem:[%s1 + $0xd0] sm:$0xff]
        %v375 = vld [vmem:[%s1 + $0xd8] sm:$0xff]
        %v376 = vld [vmem:[%s1 + $0xe0] sm:$0xff]
        %v377 = vld [vmem:[%s1 + $0xe8] sm:$0xff]
        %v378 = vld [vmem:[%s1 + $0xf0] sm:$0xff]
        %v379 = vld [vmem:[%s1 + $0xf8] sm:$0xff]
        %v380 = vld [vmem:[%s1 + $0x100] sm:$0xff]
        %v381 = vld [vmem:[%s1 + $0x108] sm:$0xff]
        %vm385 = vcmask 1046528
        %v386 = vrot.slane %v185, 1
        %v387 = vrot.slane %v187, 1
        %v388 = vsel %vm385, %v386, %v387
        %v389 = vrot.slane %v186, 1
        %v390 = vrot.slane %v188, 1
        %v391 = vsel %vm385, %v389, %v390
        %v393 = vsel %vm236, %v391, 0
        %395 = vmatprep.subr.mxu0 %v349
        %396 = vmatpush1.msra.mxu0 %v348
        %397 = vmatprep.subr.mxu0 %v351
        %398 = vmatpush1.msra.mxu0 %v350
        %399 = vmatprep.subr.mxu0 %v353
        %400 = vmatpush1.msra.mxu0 %v352
        %401 = vmatprep.subr.mxu0 %v355
        %402 = vmatpush1.msra.mxu0 %v354
        %403 = vmatprep.subr.mxu0 %v357
        %404 = vmatpush1.msra.mxu0 %v356
        %405 = vmatprep.subr.mxu0 %v359
        %406 = vmatpush1.msra.mxu0 %v358
        %407 = vmatprep.subr.mxu0 %v361
        %408 = vmatpush1.msra.mxu0 %v360
        %409 = vmatprep.subr.mxu0 %v363
        %410 = vmatpush1.msra.mxu0 %v362
        %411 = vmatprep.subr.mxu0 %v365
        %412 = vmatpush1.msra.mxu0 %v364
        %413 = vmatprep.subr.mxu0 %v367
        %414 = vmatpush1.msra.mxu0 %v366
        %415 = vmatprep.subr.mxu0 %v369
        %416 = vmatpush1.msra.mxu0 %v368
        %417 = vmatprep.subr.mxu0 %v371
        %418 = vmatpush1.msra.mxu0 %v370
        %419 = vmatprep.subr.mxu0 %v373
        %420 = vmatpush1.msra.mxu0 %v372
        %421 = vmatprep.subr.mxu0 %v375
        %422 = vmatpush1.msra.mxu0 %v374
        %423 = vmatprep.subr.mxu0 %v377
        %424 = vmatpush1.msra.mxu0 %v376
        %425 = vmatprep.subr.mxu0 %v379
        %426 = vmatpush1.msra.mxu0 %v378
        %427 = vmatprep.subr.mxu0 %v381
        %428 = vmatpush1.msra.mxu0 %v380
        %429 = vmatprep.subr.mxu0 0.0
        %430 = vmatpush1.msra.mxu0 0.0
        %431 = vmatprep.subr.mxu0 0.0
        %432 = vmatpush1.msra.mxu0 0.0
        %433 = vmatprep.subr.mxu0 0.0
        %434 = vmatpush1.msra.mxu0 0.0
        %435 = vmatprep.subr.mxu0 0.0
        %436 = vmatpush1.msra.mxu0 0.0
        %437 = vmatprep.subr.mxu0 0.0
        %438 = vmatpush1.msra.mxu0 0.0
        %439 = vmatprep.subr.mxu0 0.0
        %440 = vmatpush1.msra.mxu0 0.0
        %441 = vmatprep.subr.mxu0 0.0
        %442 = vmatpush1.msra.mxu0 0.0
        %443 = vmatprep.subr.mxu0 0.0
        %444 = vmatpush1.msra.mxu0 0.0
        %445 = vmatprep.subr.mxu0 0.0
        %446 = vmatpush1.msra.mxu0 0.0
        %447 = vmatprep.subr.mxu0 0.0
        %448 = vmatpush1.msra.mxu0 0.0
        %449 = vmatprep.subr.mxu0 0.0
        %450 = vmatpush1.msra.mxu0 0.0
        %451 = vmatprep.subr.mxu0 0.0
        %452 = vmatpush1.msra.mxu0 0.0
        %453 = vmatprep.subr.mxu0 0.0
        %454 = vmatpush1.msra.mxu0 0.0
        %455 = vmatprep.subr.mxu0 0.0
        %456 = vmatpush1.msra.mxu0 0.0
        %457 = vmatprep.subr.mxu0 0.0
        %458 = vmatpush1.msra.mxu0 0.0
        %459 = vmatprep.mubr.f32.mxu0 %v393
        %460 = vmatmul.mubr.f32.gmra.mrb[0].mxu0 %v388
        %v461 = vpop.f32.mrb[0].mxu0
        %v462 = vadd.f32 0.0, %v461
        %v463 = vpop.f32.mrb[0].mxu0
        %v464 = vadd.f32 0.0, %v463
        %465 = vdwg.mxu0
        %466 = vmatprep.subr.mxu0 %v315
        %467 = vmatpush1.msra.mxu0 %v314
        %468 = vmatprep.subr.mxu0 %v317
        %469 = vmatpush1.msra.mxu0 %v316
        %470 = vmatprep.subr.mxu0 %v319
        %471 = vmatpush1.msra.mxu0 %v318
        %472 = vmatprep.subr.mxu0 %v321
        %473 = vmatpush1.msra.mxu0 %v320
        %474 = vmatprep.subr.mxu0 %v323
        %475 = vmatpush1.msra.mxu0 %v322
        %476 = vmatprep.subr.mxu0 %v325
        %477 = vmatpush1.msra.mxu0 %v324
        %478 = vmatprep.subr.mxu0 %v327
        %479 = vmatpush1.msra.mxu0 %v326
        %480 = vmatprep.subr.mxu0 %v329
        %481 = vmatpush1.msra.mxu0 %v328
        %482 = vmatprep.subr.mxu0 %v331
        %483 = vmatpush1.msra.mxu0 %v330
        %484 = vmatprep.subr.mxu0 %v333
        %485 = vmatpush1.msra.mxu0 %v332
        %486 = vmatprep.subr.mxu0 %v335
        %487 = vmatpush1.msra.mxu0 %v334
        %488 = vmatprep.subr.mxu0 %v337
        %489 = vmatpush1.msra.mxu0 %v336
        %490 = vmatprep.subr.mxu0 %v339
        %491 = vmatpush1.msra.mxu0 %v338
        %492 = vmatprep.subr.mxu0 %v341
        %493 = vmatpush1.msra.mxu0 %v340
        %494 = vmatprep.subr.mxu0 %v343
        %495 = vmatpush1.msra.mxu0 %v342
        %496 = vmatprep.subr.mxu0 %v345
        %497 = vmatpush1.msra.mxu0 %v344
        %498 = vmatprep.subr.mxu0 %v347
        %499 = vmatpush1.msra.mxu0 %v346
        %500 = vmatprep.subr.mxu0 0.0
        %501 = vmatpush1.msra.mxu0 0.0
        %502 = vmatprep.subr.mxu0 0.0
        %503 = vmatpush1.msra.mxu0 0.0
        %504 = vmatprep.subr.mxu0 0.0
        %505 = vmatpush1.msra.mxu0 0.0
        %506 = vmatprep.subr.mxu0 0.0
        %507 = vmatpush1.msra.mxu0 0.0
        %508 = vmatprep.subr.mxu0 0.0
        %509 = vmatpush1.msra.mxu0 0.0
        %510 = vmatprep.subr.mxu0 0.0
        %511 = vmatpush1.msra.mxu0 0.0
        %512 = vmatprep.subr.mxu0 0.0
        %513 = vmatpush1.msra.mxu0 0.0
        %514 = vmatprep.subr.mxu0 0.0
        %515 = vmatpush1.msra.mxu0 0.0
        %516 = vmatprep.subr.mxu0 0.0
        %517 = vmatpush1.msra.mxu0 0.0
        %518 = vmatprep.subr.mxu0 0.0
        %519 = vmatpush1.msra.mxu0 0.0
        %520 = vmatprep.subr.mxu0 0.0
        %521 = vmatpush1.msra.mxu0 0.0
        %522 = vmatprep.subr.mxu0 0.0
        %523 = vmatpush1.msra.mxu0 0.0
        %524 = vmatprep.subr.mxu0 0.0
        %525 = vmatpush1.msra.mxu0 0.0
        %526 = vmatprep.subr.mxu0 0.0
        %527 = vmatpush1.msra.mxu0 0.0
        %528 = vmatprep.subr.mxu0 0.0
        %529 = vmatpush1.msra.mxu0 0.0
        %530 = vmatprep.mubr.f32.mxu0 %v238
        %531 = vmatmul.mubr.f32.gmra.mrb[0].mxu0 %v185
        %v532 = vpop.f32.mrb[0].mxu0
        %v533 = vadd.f32 %v462, %v532
        %v534 = vpop.f32.mrb[0].mxu0
        %v535 = vadd.f32 %v464, %v534
        %536 = vdwg.mxu0
        %v537 = vadd.f32 %v533, %v229
        %v538 = vadd.f32 %v535, %v233
        %s539 = scalar_lea.vmem %s173, 16 [#allocation2]
        %540 = vst [vmem:[%s539] sm:$0xff] %v537
        %541 = vst [vmem:[%s539 + $0x8] sm:$0xff] %v538
        %s542 = sand.u32 %s104, 1
        %s543 = sand.u32 %s104, 1
        %s544 = smul.addr %s543, 32
        %s545 = scalar_lea.vmem [#allocation2], %s544
        // Predicated region
        $region33: #{complex_conv_transpose2d.1} parent=31 // pred_check
          %p546 = pneg %p114
        $region34: #{complex_conv_transpose2d.1} parent=31 // pred_check_branch
          %548 = sbr.rel (%p546) target = $region36
        $region35: #{complex_conv_transpose2d.1} parent=31 // pred_region
          %s549 = smul.addr %s19, 2
          %s550 = smul.addr %s18, 8
          %s551 = sadd.s32 %s549, %s550
          %s552 = smul.addr %s551, 8
          %s553 = scalar_lea.vmem %s3, %s552
          // Predicated region
          $region37: #{complex_conv_transpose2d.1} parent=35 // pred_check
            _
          $region38: #{complex_conv_transpose2d.1} parent=35 // pred_check_branch
            %555 = sbr.rel (0) target = $region40
          $region39: #{complex_conv_transpose2d.1} parent=35 // pred_region
            // Predicated region
            $region41: #{complex_conv_transpose2d.1} parent=39 // pred_check
              _
            $region42: #{complex_conv_transpose2d.1} parent=39 // pred_check_branch
              %557 = sbr.rel (0) target = $region44
            $region43: #{complex_conv_transpose2d.1} parent=39 // pred_region
              loop: start=0, step=1, limit=1
              $region45: #{complex_conv_transpose2d.1} parent=43 // loop_pre_header
                _
              $region46: #{complex_conv_transpose2d.1} parent=43 // loop_header
                %s559 = sphi 0, %s563
                %p560 = scmp.ge.s32.totalorder %s559, 1
                %s564 = sphi %s545, %s545
                %s565 = sphi %s553, %s553
              $region47: #{complex_conv_transpose2d.1} parent=43 // loop_header_branch
                %562 = sbr.rel (%p560) target = $region51
              $region48: #{complex_conv_transpose2d.1} parent=43 // loop_body
                %v566 = vld [vmem:[%s564] sm:$0xff]
                %567 = vst [vmem:[%s565] sm:$0xff] %v566
                %v568 = vld [vmem:[%s564 + $0x8] sm:$0xff]
                %569 = vst [vmem:[%s565 + $0x8] sm:$0xff] %v568
                %v570 = vld [vmem:[%s564 + $0x10] sm:$0xff]
                %571 = vst [vmem:[%s565 + $0x20] sm:$0xff] %v570
                %v572 = vld [vmem:[%s564 + $0x18] sm:$0xff]
                %573 = vst [vmem:[%s565 + $0x28] sm:$0xff] %v572
              $region49: #{complex_conv_transpose2d.1} parent=43 // loop_footer
                %s563 = sadd.s32 1, %s559
              $region50: #{complex_conv_transpose2d.1} parent=43 // loop_footer_branch
                %558 = sbr.rel target = $region46
              $region51: #{complex_conv_transpose2d.1} parent=43 // loop_exit
                _
            $region44: #{complex_conv_transpose2d.1} parent=39 // pred_fallthru
              _
            // Predicated region
            $region52: #{complex_conv_transpose2d.1} parent=39 // pred_check
              _
            $region53: #{complex_conv_transpose2d.1} parent=39 // pred_check_branch
              %575 = sbr.rel target = $region55
            $region54: #{complex_conv_transpose2d.1} parent=39 // pred_region
              _
            $region55: #{complex_conv_transpose2d.1} parent=39 // pred_fallthru
              _
          $region40: #{complex_conv_transpose2d.1} parent=35 // pred_fallthru
            _
          %576 = vnop
        $region36: #{complex_conv_transpose2d.1} parent=31 // pred_fallthru
          _
      $region32: #{complex_conv_transpose2d.1} parent=5 // pred_fallthru
        _
      %p577 = scmp.le.s32.totalorder 2, %s9
      // Predicated region
      $region56: #{complex_conv_transpose2d.1} parent=5 // pred_check
        %p578 = pneg %p577
      $region57: #{complex_conv_transpose2d.1} parent=5 // pred_check_branch
        %580 = sbr.rel (%p578) target = $region59
      $region58: #{complex_conv_transpose2d.1} parent=5 // pred_region
        %s581 = ssub.s32 %s9, 2
        // Predicated region
        $region60: #{complex_conv_transpose2d.1} parent=58 // pred_check
          %p582 = pneg %p120
        $region61: #{complex_conv_transpose2d.1} parent=58 // pred_check_branch
          %584 = sbr.rel (%p582) target = $region63
        $region62: #{complex_conv_transpose2d.1} parent=58 // pred_region
          %s585 = sand.u32 %s105, 1
          %s586 = sand.u32 %s105, 1
          %s587 = smul.addr %s586, 32
          %s588 = scalar_lea.vmem [#allocation2], %s587
        $region63: #{complex_conv_transpose2d.1} parent=58 // pred_fallthru
          _
      $region59: #{complex_conv_transpose2d.1} parent=5 // pred_fallthru
        _
    $region6: #{complex_conv_transpose2d.1} parent=1 // loop_footer
      %s13 = sadd.s32 1, %s9
    $region7: #{complex_conv_transpose2d.1} parent=1 // loop_footer_branch
      %8 = sbr.rel target = $region3
    $region8: #{complex_conv_transpose2d.1} parent=1 // loop_exit
      _

// kernel: custom-call.2
$region0: #{custom-call.2}
  %s0 = inlined_call_operand.vmem [shape: f32[2,4,32,32], index: 0, kind: input, shape index: {}]
  %s1 = inlined_call_operand.vmem [shape: f32[2,4,32,32], index: 1, kind: input, shape index: {}]
  %s2 = inlined_call_operand.vmem [shape: c64[2,4,32,32], index: 2, kind: output, shape index: {}]
  %s4 = scalar_lea.vmem %s2, 256
  %v5 = vld [vmem:[%s0] sm:$0xff]
  %6 = vst [vmem:[%s2] sm:$0xff] %v5
  %s7 = scalar_lea.vmem %s2, 8
  %s8 = scalar_lea.vmem %s0, 8
  %v9 = vld [vmem:[%s8] sm:$0xff]
  %10 = vst [vmem:[%s7] sm:$0xff] %v9
  %s11 = scalar_lea.vmem %s2, 16
  %s12 = scalar_lea.vmem %s0, 16
  %v13 = vld [vmem:[%s12] sm:$0xff]
  %14 = vst [vmem:[%s11] sm:$0xff] %v13
  %s15 = scalar_lea.vmem %s2, 24
  %s16 = scalar_lea.vmem %s0, 24
  %v17 = vld [vmem:[%s16] sm:$0xff]
  %18 = vst [vmem:[%s15] sm:$0xff] %v17
  %s19 = scalar_lea.vmem %s2, 32
  %s20 = scalar_lea.vmem %s0, 32
  %v21 = vld [vmem:[%s20] sm:$0xff]
  %22 = vst [vmem:[%s19] sm:$0xff] %v21
  %s23 = scalar_lea.vmem %s2, 40
  %s24 = scalar_lea.vmem %s0, 40
  %v25 = vld [vmem:[%s24] sm:$0xff]
  %26 = vst [vmem:[%s23] sm:$0xff] %v25
  %s27 = scalar_lea.vmem %s2, 48
  %s28 = scalar_lea.vmem %s0, 48
  %v29 = vld [vmem:[%s28] sm:$0xff]
  %30 = vst [vmem:[%s27] sm:$0xff] %v29
  %s31 = scalar_lea.vmem %s2, 56
  %s32 = scalar_lea.vmem %s0, 56
  %v33 = vld [vmem:[%s32] sm:$0xff]
  %34 = vst [vmem:[%s31] sm:$0xff] %v33
  %s35 = scalar_lea.vmem %s2, 64
  %s36 = scalar_lea.vmem %s0, 64
  %v37 = vld [vmem:[%s36] sm:$0xff]
  %38 = vst [vmem:[%s35] sm:$0xff] %v37
  %s39 = scalar_lea.vmem %s2, 72
  %s40 = scalar_lea.vmem %s0, 72
  %v41 = vld [vmem:[%s40] sm:$0xff]
  %42 = vst [vmem:[%s39] sm:$0xff] %v41
  %s43 = scalar_lea.vmem %s2, 80
  %s44 = scalar_lea.vmem %s0, 80
  %v45 = vld [vmem:[%s44] sm:$0xff]
  %46 = vst [vmem:[%s43] sm:$0xff] %v45
  %s47 = scalar_lea.vmem %s2, 88
  %s48 = scalar_lea.vmem %s0, 88
  %v49 = vld [vmem:[%s48] sm:$0xff]
  %50 = vst [vmem:[%s47] sm:$0xff] %v49
  %s51 = scalar_lea.vmem %s2, 96
  %s52 = scalar_lea.vmem %s0, 96
  %v53 = vld [vmem:[%s52] sm:$0xff]
  %54 = vst [vmem:[%s51] sm:$0xff] %v53
  %s55 = scalar_lea.vmem %s2, 104
  %s56 = scalar_lea.vmem %s0, 104
  %v57 = vld [vmem:[%s56] sm:$0xff]
  %58 = vst [vmem:[%s55] sm:$0xff] %v57
  %s59 = scalar_lea.vmem %s2, 112
  %s60 = scalar_lea.vmem %s0, 112
  %v61 = vld [vmem:[%s60] sm:$0xff]
  %62 = vst [vmem:[%s59] sm:$0xff] %v61
  %s63 = scalar_lea.vmem %s2, 120
  %s64 = scalar_lea.vmem %s0, 120
  %v65 = vld [vmem:[%s64] sm:$0xff]
  %66 = vst [vmem:[%s63] sm:$0xff] %v65
  %s67 = scalar_lea.vmem %s2, 128
  %s68 = scalar_lea.vmem %s0, 128
  %v69 = vld [vmem:[%s68] sm:$0xff]
  %70 = vst [vmem:[%s67] sm:$0xff] %v69
  %s71 = scalar_lea.vmem %s2, 136
  %s72 = scalar_lea.vmem %s0, 136
  %v73 = vld [vmem:[%s72] sm:$0xff]
  %74 = vst [vmem:[%s71] sm:$0xff] %v73
  %s75 = scalar_lea.vmem %s2, 144
  %s76 = scalar_lea.vmem %s0, 144
  %v77 = vld [vmem:[%s76] sm:$0xff]
  %78 = vst [vmem:[%s75] sm:$0xff] %v77
  %s79 = scalar_lea.vmem %s2, 152
  %s80 = scalar_lea.vmem %s0, 152
  %v81 = vld [vmem:[%s80] sm:$0xff]
  %82 = vst [vmem:[%s79] sm:$0xff] %v81
  %s83 = scalar_lea.vmem %s2, 160
  %s84 = scalar_lea.vmem %s0, 160
  %v85 = vld [vmem:[%s84] sm:$0xff]
  %86 = vst [vmem:[%s83] sm:$0xff] %v85
  %s87 = scalar_lea.vmem %s2, 168
  %s88 = scalar_lea.vmem %s0, 168
  %v89 = vld [vmem:[%s88] sm:$0xff]
  %90 = vst [vmem:[%s87] sm:$0xff] %v89
  %s91 = scalar_lea.vmem %s2, 176
  %s92 = scalar_lea.vmem %s0, 176
  %v93 = vld [vmem:[%s92] sm:$0xff]
  %94 = vst [vmem:[%s91] sm:$0xff] %v93
  %s95 = scalar_lea.vmem %s2, 184
  %s96 = scalar_lea.vmem %s0, 184
  %v97 = vld [vmem:[%s96] sm:$0xff]
  %98 = vst [vmem:[%s95] sm:$0xff] %v97
  %s99 = scalar_lea.vmem %s2, 192
  %s100 = scalar_lea.vmem %s0, 192
  %v101 = vld [vmem:[%s100] sm:$0xff]
  %102 = vst [vmem:[%s99] sm:$0xff] %v101
  %s103 = scalar_lea.vmem %s2, 200
  %s104 = scalar_lea.vmem %s0, 200
  %v105 = vld [vmem:[%s104] sm:$0xff]
  %106 = vst [vmem:[%s103] sm:$0xff] %v105
  %s107 = scalar_lea.vmem %s2, 208
  %s108 = scalar_lea.vmem %s0, 208
  %v109 = vld [vmem:[%s108] sm:$0xff]
  %110 = vst [vmem:[%s107] sm:$0xff] %v109
  %s111 = scalar_lea.vmem %s2, 216
  %s112 = scalar_lea.vmem %s0, 216
  %v113 = vld [vmem:[%s112] sm:$0xff]
  %114 = vst [vmem:[%s111] sm:$0xff] %v113
  %s115 = scalar_lea.vmem %s2, 224
  %s116 = scalar_lea.vmem %s0, 224
  %v117 = vld [vmem:[%s116] sm:$0xff]
  %118 = vst [vmem:[%s115] sm:$0xff] %v117
  %s119 = scalar_lea.vmem %s2, 232
  %s120 = scalar_lea.vmem %s0, 232
  %v121 = vld [vmem:[%s120] sm:$0xff]
  %122 = vst [vmem:[%s119] sm:$0xff] %v121
  %s123 = scalar_lea.vmem %s2, 240
  %s124 = scalar_lea.vmem %s0, 240
  %v125 = vld [vmem:[%s124] sm:$0xff]
  %126 = vst [vmem:[%s123] sm:$0xff] %v125
  %s127 = scalar_lea.vmem %s2, 248
  %s128 = scalar_lea.vmem %s0, 248
  %v129 = vld [vmem:[%s128] sm:$0xff]
  %130 = vst [vmem:[%s127] sm:$0xff] %v129
  %v131 = vld [vmem:[%s1] sm:$0xff]
  %132 = vst [vmem:[%s4] sm:$0xff] %v131
  %s133 = scalar_lea.vmem %s4, 8
  %s134 = scalar_lea.vmem %s1, 8
  %v135 = vld [vmem:[%s134] sm:$0xff]
  %136 = vst [vmem:[%s133] sm:$0xff] %v135
  %s137 = scalar_lea.vmem %s4, 16
  %s138 = scalar_lea.vmem %s1, 16
  %v139 = vld [vmem:[%s138] sm:$0xff]
  %140 = vst [vmem:[%s137] sm:$0xff] %v139
  %s141 = scalar_lea.vmem %s4, 24
  %s142 = scalar_lea.vmem %s1, 24
  %v143 = vld [vmem:[%s142] sm:$0xff]
  %144 = vst [vmem:[%s141] sm:$0xff] %v143
  %s145 = scalar_lea.vmem %s4, 32
  %s146 = scalar_lea.vmem %s1, 32
  %v147 = vld [vmem:[%s146] sm:$0xff]
  %148 = vst [vmem:[%s145] sm:$0xff] %v147
  %s149 = scalar_lea.vmem %s4, 40
  %s150 = scalar_lea.vmem %s1, 40
  %v151 = vld [vmem:[%s150] sm:$0xff]
  %152 = vst [vmem:[%s149] sm:$0xff] %v151
  %s153 = scalar_lea.vmem %s4, 48
  %s154 = scalar_lea.vmem %s1, 48
  %v155 = vld [vmem:[%s154] sm:$0xff]
  %156 = vst [vmem:[%s153] sm:$0xff] %v155
  %s157 = scalar_lea.vmem %s4, 56
  %s158 = scalar_lea.vmem %s1, 56
  %v159 = vld [vmem:[%s158] sm:$0xff]
  %160 = vst [vmem:[%s157] sm:$0xff] %v159
  %s161 = scalar_lea.vmem %s4, 64
  %s162 = scalar_lea.vmem %s1, 64
  %v163 = vld [vmem:[%s162] sm:$0xff]
  %164 = vst [vmem:[%s161] sm:$0xff] %v163
  %s165 = scalar_lea.vmem %s4, 72
  %s166 = scalar_lea.vmem %s1, 72
  %v167 = vld [vmem:[%s166] sm:$0xff]
  %168 = vst [vmem:[%s165] sm:$0xff] %v167
  %s169 = scalar_lea.vmem %s4, 80
  %s170 = scalar_lea.vmem %s1, 80
  %v171 = vld [vmem:[%s170] sm:$0xff]
  %172 = vst [vmem:[%s169] sm:$0xff] %v171
  %s173 = scalar_lea.vmem %s4, 88
  %s174 = scalar_lea.vmem %s1, 88
  %v175 = vld [vmem:[%s174] sm:$0xff]
  %176 = vst [vmem:[%s173] sm:$0xff] %v175
  %s177 = scalar_lea.vmem %s4, 96
  %s178 = scalar_lea.vmem %s1, 96
  %v179 = vld [vmem:[%s178] sm:$0xff]
  %180 = vst [vmem:[%s177] sm:$0xff] %v179
  %s181 = scalar_lea.vmem %s4, 104
  %s182 = scalar_lea.vmem %s1, 104
  %v183 = vld [vmem:[%s182] sm:$0xff]
  %184 = vst [vmem:[%s181] sm:$0xff] %v183
  %s185 = scalar_lea.vmem %s4, 112
  %s186 = scalar_lea.vmem %s1, 112
  %v187 = vld [vmem:[%s186] sm:$0xff]
  %188 = vst [vmem:[%s185] sm:$0xff] %v187
  %s189 = scalar_lea.vmem %s4, 120
  %s190 = scalar_lea.vmem %s1, 120
  %v191 = vld [vmem:[%s190] sm:$0xff]
  %192 = vst [vmem:[%s189] sm:$0xff] %v191
  %s193 = scalar_lea.vmem %s4, 128
  %s194 = scalar_lea.vmem %s1, 128
  %v195 = vld [vmem:[%s194] sm:$0xff]
  %196 = vst [vmem:[%s193] sm:$0xff] %v195
  %s197 = scalar_lea.vmem %s4, 136
  %s198 = scalar_lea.vmem %s1, 136
  %v199 = vld [vmem:[%s198] sm:$0xff]
  %200 = vst [vmem:[%s197] sm:$0xff] %v199
  %s201 = scalar_lea.vmem %s4, 144
  %s202 = scalar_lea.vmem %s1, 144
  %v203 = vld [vmem:[%s202] sm:$0xff]
  %204 = vst [vmem:[%s201] sm:$0xff] %v203
  %s205 = scalar_lea.vmem %s4, 152
  %s206 = scalar_lea.vmem %s1, 152
  %v207 = vld [vmem:[%s206] sm:$0xff]
  %208 = vst [vmem:[%s205] sm:$0xff] %v207
  %s209 = scalar_lea.vmem %s4, 160
  %s210 = scalar_lea.vmem %s1, 160
  %v211 = vld [vmem:[%s210] sm:$0xff]
  %212 = vst [vmem:[%s209] sm:$0xff] %v211
  %s213 = scalar_lea.vmem %s4, 168
  %s214 = scalar_lea.vmem %s1, 168
  %v215 = vld [vmem:[%s214] sm:$0xff]
  %216 = vst [vmem:[%s213] sm:$0xff] %v215
  %s217 = scalar_lea.vmem %s4, 176
  %s218 = scalar_lea.vmem %s1, 176
  %v219 = vld [vmem:[%s218] sm:$0xff]
  %220 = vst [vmem:[%s217] sm:$0xff] %v219
  %s221 = scalar_lea.vmem %s4, 184
  %s222 = scalar_lea.vmem %s1, 184
  %v223 = vld [vmem:[%s222] sm:$0xff]
  %224 = vst [vmem:[%s221] sm:$0xff] %v223
  %s225 = scalar_lea.vmem %s4, 192
  %s226 = scalar_lea.vmem %s1, 192
  %v227 = vld [vmem:[%s226] sm:$0xff]
  %228 = vst [vmem:[%s225] sm:$0xff] %v227
  %s229 = scalar_lea.vmem %s4, 200
  %s230 = scalar_lea.vmem %s1, 200
  %v231 = vld [vmem:[%s230] sm:$0xff]
  %232 = vst [vmem:[%s229] sm:$0xff] %v231
  %s233 = scalar_lea.vmem %s4, 208
  %s234 = scalar_lea.vmem %s1, 208
  %v235 = vld [vmem:[%s234] sm:$0xff]
  %236 = vst [vmem:[%s233] sm:$0xff] %v235
  %s237 = scalar_lea.vmem %s4, 216
  %s238 = scalar_lea.vmem %s1, 216
  %v239 = vld [vmem:[%s238] sm:$0xff]
  %240 = vst [vmem:[%s237] sm:$0xff] %v239
  %s241 = scalar_lea.vmem %s4, 224
  %s242 = scalar_lea.vmem %s1, 224
  %v243 = vld [vmem:[%s242] sm:$0xff]
  %244 = vst [vmem:[%s241] sm:$0xff] %v243
  %s245 = scalar_lea.vmem %s4, 232
  %s246 = scalar_lea.vmem %s1, 232
  %v247 = vld [vmem:[%s246] sm:$0xff]
  %248 = vst [vmem:[%s245] sm:$0xff] %v247
  %s249 = scalar_lea.vmem %s4, 240
  %s250 = scalar_lea.vmem %s1, 240
  %v251 = vld [vmem:[%s250] sm:$0xff]
  %252 = vst [vmem:[%s249] sm:$0xff] %v251
  %s253 = scalar_lea.vmem %s4, 248
  %s254 = scalar_lea.vmem %s1, 248
  %v255 = vld [vmem:[%s254] sm:$0xff]
  %256 = vst [vmem:[%s253] sm:$0xff] %v255

</llo_original>
